<compile_context>
chip_gen: v7x
topology: tpu7x:2x2x1
jax: 0.10.0
libtpu: 0.0.40
codegen_flags: <defaults>
</compile_context>

<pallas_src>
import numpy as np
import jax
import jax.numpy as jnp
from jax.experimental import pallas as pl
from jax.experimental.pallas import tpu as pltpu

FEATURES = 128
NUM_CLASSES = 4
N_PAD = 128  # lane-dense width for the layer-3 MXU pass (compute only; store is 4-wide)


def dnn_kernel(x_ref, w1_ref, b1_ref, a1_ref, w2_ref, b2_ref, a2_ref,
               w3_ref, b3_ref, o_ref):
    # PReLU slopes: scalar reads from SMEM, done once up front.
    a1 = a1_ref[0, 0]
    a2 = a2_ref[0, 0]

    # Cast to bf16 in-kernel (free VPU slack); avoids a wrapper-side pass over x.
    x = x_ref[...].astype(jnp.bfloat16)  # (TB, 128)

    # ---- Linear(128,128) + PReLU ----
    h1 = jnp.dot(x, w1_ref[...], preferred_element_type=jnp.float32) + b1_ref[...]
    h1 = jnp.where(h1 > 0.0, h1, a1 * h1)

    # ---- Linear(128,128) + PReLU ----
    h2 = jnp.dot(h1.astype(jnp.bfloat16), w2_ref[...],
                 preferred_element_type=jnp.float32) + b2_ref[...]
    h2 = jnp.where(h2 > 0.0, h2, a2 * h2)

    # ---- Linear(128, 4), computed lane-dense on the MXU (zero-padded W3 columns).
    # The pad columns carry a -1e30 bias, so they contribute exp(...) == 0 below.
    logits = jnp.dot(h2.astype(jnp.bfloat16), w3_ref[...],
                     preferred_element_type=jnp.float32) + b3_ref[...]

    # ---- LogSoftmax over last dim (PyTorch dim=1 for 2-D input) ----
    m = jnp.max(logits, axis=-1, keepdims=True)       # pad cols (-1e30) never win the max
    z = logits - m
    lse = jnp.log(jnp.sum(jnp.exp(z), axis=-1, keepdims=True))
    # Store only the 4 real columns (16 B/row of HBM writeback instead of 512 B/row).
    o_ref[...] = (z[:, :NUM_CLASSES] - lse).astype(o_ref.dtype)


def dnn_forward(x, params, *, tb=2048):
    """x: [B, 128] (any float dtype). Returns [B, 4] float32 log-probabilities."""
    w1, b1, a1, w2, b2, a2, w3, b3 = params
    B = x.shape[0]

    # Weight casts are tiny (128x128); keep them in the wrapper. x is NOT pre-cast/padded.
    w1b = w1.astype(jnp.bfloat16)
    w2b = w2.astype(jnp.bfloat16)
    # Zero-pad W3 to 128 lane-dense columns; bake the softmax mask into the bias
    # (large finite negative, not -inf, so a future bf16 path can't produce inf/NaN).
    w3p = jnp.zeros((FEATURES, N_PAD), jnp.bfloat16).at[:, :NUM_CLASSES].set(
        w3.astype(jnp.bfloat16))
    b3p = jnp.full((1, N_PAD), -1e30, jnp.float32).at[:, :NUM_CLASSES].set(b3)

    # Batch tile: multiple of 8 sublanes, no bigger than the (rounded-up) batch.
    # tb=2048 keeps the per-TC footprint (2x in + 2x out buffers + f32 intermediates)
    # well under 32 MiB scoped VMEM (fits v5e/v6e/v7x); sweep 2048-4096.
    tb = int(min(tb, max(8, ((B + 7) // 8) * 8)))
    tb = max(8, (tb // 8) * 8)
    # Ragged tail handled by the grid: OOB rows of the last tile read unspecified data,
    # which is safe because rows are independent and the output store is clipped to B.
    grid = pl.cdiv(B, tb)

    const2d = lambda shape: pl.BlockSpec(shape, lambda i: (0, 0))
    smem = pl.BlockSpec(memory_space=pltpu.MemorySpace.SMEM)

    out = pl.pallas_call(
        dnn_kernel,
        out_shape=jax.ShapeDtypeStruct((B, NUM_CLASSES), jnp.float32),
        grid=(grid,),
        in_specs=[
            pl.BlockSpec((tb, FEATURES), lambda i: (i, 0)),   # x tile (pipelined)
            const2d((FEATURES, FEATURES)),                    # w1 (VMEM-resident)
            const2d((1, FEATURES)),                           # b1
            smem,                                             # PReLU slope 1 (scalar)
            const2d((FEATURES, FEATURES)),                    # w2
            const2d((1, FEATURES)),                           # b2
            smem,                                             # PReLU slope 2 (scalar)
            const2d((FEATURES, N_PAD)),                       # w3 (padded)
            const2d((1, N_PAD)),                              # b3 (padded, mask baked in)
        ],
        # Last block dim (4) equals the full array dim -> legal; writes only real columns.
        out_specs=pl.BlockSpec((tb, NUM_CLASSES), lambda i: (i, 0)),
        compiler_params=pltpu.CompilerParams(
            dimension_semantics=("parallel",),
            vmem_limit_bytes=32 * 1024 * 1024),
    )(x, w1b, b1, a1, w2b, b2, a2, w3p, b3p)

    return out


def init_params(key):
    """Deterministic synthetic parameters with the shapes implied by DNN.__init__."""
    ks = jax.random.split(key, 6)
    # weights stored as [in, out] (transposed vs. torch's [out, in]) so the kernel does x @ W
    w1 = jax.random.normal(ks[0], (FEATURES, FEATURES), jnp.float32) * 0.05
    b1 = jax.random.normal(ks[1], (1, FEATURES), jnp.float32) * 0.05
    w2 = jax.random.normal(ks[2], (FEATURES, FEATURES), jnp.float32) * 0.05
    b2 = jax.random.normal(ks[3], (1, FEATURES), jnp.float32) * 0.05
    w3 = jax.random.normal(ks[4], (FEATURES, NUM_CLASSES), jnp.float32) * 0.05
    b3 = jax.random.normal(ks[5], (1, NUM_CLASSES), jnp.float32) * 0.05
    # PReLU scalar slopes, PyTorch default init = 0.25
    a1 = jnp.full((1, 1), 0.25, jnp.float32)
    a2 = jnp.full((1, 1), 0.25, jnp.float32)
    return w1, b1, a1, w2, b2, a2, w3, b3


def dnn_reference(x, params):
    """Plain-JAX reference with the same bf16-operand / f32-accumulate precision."""
    w1, b1, a1, w2, b2, a2, w3, b3 = params
    h1 = jnp.dot(x.astype(jnp.bfloat16), w1.astype(jnp.bfloat16),
                 preferred_element_type=jnp.float32) + b1
    h1 = jnp.where(h1 > 0, h1, a1[0, 0] * h1)
    h2 = jnp.dot(h1.astype(jnp.bfloat16), w2.astype(jnp.bfloat16),
                 preferred_element_type=jnp.float32) + b2
    h2 = jnp.where(h2 > 0, h2, a2[0, 0] * h2)
    logits = jnp.dot(h2.astype(jnp.bfloat16), w3.astype(jnp.bfloat16),
                     preferred_element_type=jnp.float32) + b3
    return jax.nn.log_softmax(logits, axis=-1)


if __name__ == "__main__":
    key = jax.random.PRNGKey(0)
    kx, kp = jax.random.split(key)

    B = 8  # small batch
    x = jax.random.normal(kx, (B, FEATURES), jnp.float32)
    params = init_params(kp)

    out = jax.block_until_ready(dnn_forward(x, params))

    ref = dnn_reference(x, params)
    if not np.allclose(np.asarray(out), np.asarray(ref), atol=1e-3, rtol=1e-3):
        raise AssertionError("Pallas kernel output mismatch vs JAX reference")

    print("KERNEL_OK")
</pallas_src>

<mosaic_0001>
module attributes {stable_mosaic.version = 11 : i64} {
  func.func @dnn_kernel(%arg0: i32, %arg1: memref<8x128xf32, #tpu.memory_space<vmem>>, %arg2: memref<128x128xbf16, #tpu.memory_space<vmem>>, %arg3: memref<1x128xf32, #tpu.memory_space<vmem>>, %arg4: memref<1x1xf32, #tpu.memory_space<smem>>, %arg5: memref<128x128xbf16, #tpu.memory_space<vmem>>, %arg6: memref<1x128xf32, #tpu.memory_space<vmem>>, %arg7: memref<1x1xf32, #tpu.memory_space<smem>>, %arg8: memref<128x128xbf16, #tpu.memory_space<vmem>>, %arg9: memref<1x128xf32, #tpu.memory_space<vmem>>, %arg10: memref<8x4xf32, #tpu.memory_space<vmem>>) attributes {dimension_semantics = [#tpu.dimension_semantics<parallel>], iteration_bounds = array<i64: 1>, scalar_prefetch = 0 : i64, scratch_operands = 0 : i64, tpu.core_type = #tpu.core_type<tc>, window_params = [{transform_indices = @transform_0, window_bounds = array<i64: 8, 128>}, {pipeline_mode = #tpu.pipeline_mode<synchronous>, transform_indices = @transform_1, window_bounds = array<i64: 128, 128>}, {pipeline_mode = #tpu.pipeline_mode<synchronous>, transform_indices = @transform_2, window_bounds = array<i64: 1, 128>}, {transform_indices = @transform_3, window_bounds = array<i64: 1, 1>}, {pipeline_mode = #tpu.pipeline_mode<synchronous>, transform_indices = @transform_4, window_bounds = array<i64: 128, 128>}, {pipeline_mode = #tpu.pipeline_mode<synchronous>, transform_indices = @transform_5, window_bounds = array<i64: 1, 128>}, {transform_indices = @transform_6, window_bounds = array<i64: 1, 1>}, {pipeline_mode = #tpu.pipeline_mode<synchronous>, transform_indices = @transform_7, window_bounds = array<i64: 128, 128>}, {pipeline_mode = #tpu.pipeline_mode<synchronous>, transform_indices = @transform_8, window_bounds = array<i64: 1, 128>}, {transform_indices = @transform_9, window_bounds = array<i64: 8, 4>}]} {
    %c0 = arith.constant 0 : index
    %c0_0 = arith.constant 0 : index
    %0 = memref.load %arg4[%c0, %c0_0] : memref<1x1xf32, #tpu.memory_space<smem>>
    %c0_1 = arith.constant 0 : index
    %c0_2 = arith.constant 0 : index
    %1 = memref.load %arg7[%c0_1, %c0_2] : memref<1x1xf32, #tpu.memory_space<smem>>
    %c0_3 = arith.constant 0 : index
    %c0_4 = arith.constant 0 : index
    %2 = vector.load %arg1[%c0_3, %c0_4] : memref<8x128xf32, #tpu.memory_space<vmem>>, vector<8x128xf32>
    %3 = arith.truncf %2 : vector<8x128xf32> to vector<8x128xbf16>
    %c0_5 = arith.constant 0 : index
    %c0_6 = arith.constant 0 : index
    %4 = vector.load %arg2[%c0_5, %c0_6] : memref<128x128xbf16, #tpu.memory_space<vmem>>, vector<128x128xbf16>
    %cst = arith.constant dense<0.000000e+00> : vector<8x128xf32>
    %5 = tpu.matmul %3, %4, %cst {dimension_numbers = #tpu.dot_dimension_numbers<[1], [0], [0], [1], [0, 0, 1, 1], [], []>} : vector<8x128xbf16>, vector<128x128xbf16>, vector<8x128xf32> -> vector<8x128xf32>
    %c0_7 = arith.constant 0 : index
    %c0_8 = arith.constant 0 : index
    %6 = vector.load %arg3[%c0_7, %c0_8] : memref<1x128xf32, #tpu.memory_space<vmem>>, vector<1x128xf32>
    %7 = vector.broadcast %6 : vector<1x128xf32> to vector<8x128xf32>
    %8 = arith.addf %5, %7 : vector<8x128xf32>
    %cst_9 = arith.constant 0.000000e+00 : f32
    %9 = vector.broadcast %cst_9 : f32 to vector<8x128xf32>
    %10 = arith.cmpf ogt, %8, %9 : vector<8x128xf32>
    %11 = vector.broadcast %0 : f32 to vector<8x128xf32>
    %12 = arith.mulf %11, %8 : vector<8x128xf32>
    %13 = arith.select %10, %8, %12 : vector<8x128xi1>, vector<8x128xf32>
    %14 = arith.truncf %13 : vector<8x128xf32> to vector<8x128xbf16>
    %c0_10 = arith.constant 0 : index
    %c0_11 = arith.constant 0 : index
    %15 = vector.load %arg5[%c0_10, %c0_11] : memref<128x128xbf16, #tpu.memory_space<vmem>>, vector<128x128xbf16>
    %cst_12 = arith.constant dense<0.000000e+00> : vector<8x128xf32>
    %16 = tpu.matmul %14, %15, %cst_12 {dimension_numbers = #tpu.dot_dimension_numbers<[1], [0], [0], [1], [0, 0, 1, 1], [], []>} : vector<8x128xbf16>, vector<128x128xbf16>, vector<8x128xf32> -> vector<8x128xf32>
    %c0_13 = arith.constant 0 : index
    %c0_14 = arith.constant 0 : index
    %17 = vector.load %arg6[%c0_13, %c0_14] : memref<1x128xf32, #tpu.memory_space<vmem>>, vector<1x128xf32>
    %18 = vector.broadcast %17 : vector<1x128xf32> to vector<8x128xf32>
    %19 = arith.addf %16, %18 : vector<8x128xf32>
    %cst_15 = arith.constant 0.000000e+00 : f32
    %20 = vector.broadcast %cst_15 : f32 to vector<8x128xf32>
    %21 = arith.cmpf ogt, %19, %20 : vector<8x128xf32>
    %22 = vector.broadcast %1 : f32 to vector<8x128xf32>
    %23 = arith.mulf %22, %19 : vector<8x128xf32>
    %24 = arith.select %21, %19, %23 : vector<8x128xi1>, vector<8x128xf32>
    %25 = arith.truncf %24 : vector<8x128xf32> to vector<8x128xbf16>
    %c0_16 = arith.constant 0 : index
    %c0_17 = arith.constant 0 : index
    %26 = vector.load %arg8[%c0_16, %c0_17] : memref<128x128xbf16, #tpu.memory_space<vmem>>, vector<128x128xbf16>
    %cst_18 = arith.constant dense<0.000000e+00> : vector<8x128xf32>
    %27 = tpu.matmul %25, %26, %cst_18 {dimension_numbers = #tpu.dot_dimension_numbers<[1], [0], [0], [1], [0, 0, 1, 1], [], []>} : vector<8x128xbf16>, vector<128x128xbf16>, vector<8x128xf32> -> vector<8x128xf32>
    %c0_19 = arith.constant 0 : index
    %c0_20 = arith.constant 0 : index
    %28 = vector.load %arg9[%c0_19, %c0_20] : memref<1x128xf32, #tpu.memory_space<vmem>>, vector<1x128xf32>
    %29 = vector.broadcast %28 : vector<1x128xf32> to vector<8x128xf32>
    %30 = arith.addf %27, %29 : vector<8x128xf32>
    %cst_21 = arith.constant dense<0xFF800000> : vector<8xf32>
    %31 = vector.multi_reduction <maximumf>, %30, %cst_21 [1] : vector<8x128xf32> to vector<8xf32>
    %32 = vector.shape_cast %31 : vector<8xf32> to vector<8x1xf32>
    %33 = vector.broadcast %32 : vector<8x1xf32> to vector<8x128xf32>
    %34 = arith.subf %30, %33 : vector<8x128xf32>
    %35 = math.exp %34 : vector<8x128xf32>
    %cst_22 = arith.constant dense<0.000000e+00> : vector<8xf32>
    %36 = vector.multi_reduction <add>, %35, %cst_22 [1] : vector<8x128xf32> to vector<8xf32>
    %37 = vector.shape_cast %36 : vector<8xf32> to vector<8x1xf32>
    %38 = math.log %37 : vector<8x1xf32>
    %39 = vector.extract_strided_slice %34 {offsets = [0, 0], sizes = [8, 4], strides = [1, 1]} : vector<8x128xf32> to vector<8x4xf32>
    %40 = vector.broadcast %38 : vector<8x1xf32> to vector<8x4xf32>
    %41 = arith.subf %39, %40 : vector<8x4xf32>
    %c0_23 = arith.constant 0 : index
    %c0_24 = arith.constant 0 : index
    %42 = vector.load %arg10[%c0_23, %c0_24] : memref<8x4xf32, #tpu.memory_space<vmem>>, vector<8x4xf32>
    tpu.vector_store %arg10[%c0_23, %c0_24], %41 {strides = array<i32>} : memref<8x4xf32, #tpu.memory_space<vmem>>, vector<8x4xf32>,
    return
  }
  func.func @transform_0(%arg0: i32) -> (i32, i32) {
    %c0_i32 = arith.constant 0 : i32
    %c0_i32_0 = arith.constant 0 : i32
    return %arg0, %c0_i32 : i32, i32
  }
  func.func @transform_1(%arg0: i32) -> (i32, i32) {
    %c0_i32 = arith.constant 0 : i32
    %c0_i32_0 = arith.constant 0 : i32
    %c0_i32_1 = arith.constant 0 : i32
    return %c0_i32, %c0_i32_0 : i32, i32
  }
  func.func @transform_2(%arg0: i32) -> (i32, i32) {
    %c0_i32 = arith.constant 0 : i32
    %c0_i32_0 = arith.constant 0 : i32
    %c0_i32_1 = arith.constant 0 : i32
    return %c0_i32, %c0_i32_0 : i32, i32
  }
  func.func @transform_3(%arg0: i32) -> (i32, i32) {
    %c0_i32 = arith.constant 0 : i32
    %c0_i32_0 = arith.constant 0 : i32
    %c0_i32_1 = arith.constant 0 : i32
    return %c0_i32, %c0_i32_0 : i32, i32
  }
  func.func @transform_4(%arg0: i32) -> (i32, i32) {
    %c0_i32 = arith.constant 0 : i32
    %c0_i32_0 = arith.constant 0 : i32
    %c0_i32_1 = arith.constant 0 : i32
    return %c0_i32, %c0_i32_0 : i32, i32
  }
  func.func @transform_5(%arg0: i32) -> (i32, i32) {
    %c0_i32 = arith.constant 0 : i32
    %c0_i32_0 = arith.constant 0 : i32
    %c0_i32_1 = arith.constant 0 : i32
    return %c0_i32, %c0_i32_0 : i32, i32
  }
  func.func @transform_6(%arg0: i32) -> (i32, i32) {
    %c0_i32 = arith.constant 0 : i32
    %c0_i32_0 = arith.constant 0 : i32
    %c0_i32_1 = arith.constant 0 : i32
    return %c0_i32, %c0_i32_0 : i32, i32
  }
  func.func @transform_7(%arg0: i32) -> (i32, i32) {
    %c0_i32 = arith.constant 0 : i32
    %c0_i32_0 = arith.constant 0 : i32
    %c0_i32_1 = arith.constant 0 : i32
    return %c0_i32, %c0_i32_0 : i32, i32
  }
  func.func @transform_8(%arg0: i32) -> (i32, i32) {
    %c0_i32 = arith.constant 0 : i32
    %c0_i32_0 = arith.constant 0 : i32
    %c0_i32_1 = arith.constant 0 : i32
    return %c0_i32, %c0_i32_0 : i32, i32
  }
  func.func @transform_9(%arg0: i32) -> (i32, i32) {
    %c0_i32 = arith.constant 0 : i32
    %c0_i32_0 = arith.constant 0 : i32
    return %arg0, %c0_i32 : i32, i32
  }
}

</mosaic_0001>

<llo_original>
// kernel: tpu_custom_call.1
$region0: #{tpu_custom_call.1}
  #allocation0 [shape = 'u32[]', space=smem, size = 0x4, offset = 0x4, fixed_abs, tag = 'smem constant byte address 0x4 - core index']
  #allocation1 [shape = 'u32[144,128]{1,0:T(1,128)}', space=vmem, size = 0x12000, scoped, tag = 'internal scratch']
  #allocation2 [shape = 'f32[1,1]{1,0:T(1,128)S(6)}', space=smem, size = 0x200, scoped, tag = 'scoped memory for tpu_custom_call.1']
  #allocation3 [shape = 'f32[1,1]{1,0:T(1,128)S(6)}', space=smem, size = 0x200, scoped, tag = 'scoped memory for tpu_custom_call.1']
  %s0 = inlined_call_operand.hbm [shape: f32[8,128], index: 0, kind: input, shape index: {}]
  %s1 = inlined_call_operand.hbm [shape: bf16[128,128], index: 1, kind: input, shape index: {}]
  %s2 = inlined_call_operand.vmem [shape: f32[1,128], index: 2, kind: input, shape index: {}]
  %s3 = inlined_call_operand.<no memory space> [shape: f32[1,1], index: 3, kind: input, shape index: {}]
  %s4 = inlined_call_operand.hbm [shape: bf16[128,128], index: 4, kind: input, shape index: {}]
  %s5 = inlined_call_operand.vmem [shape: f32[1,128], index: 5, kind: input, shape index: {}]
  %s6 = inlined_call_operand.<no memory space> [shape: f32[1,1], index: 6, kind: input, shape index: {}]
  %s7 = inlined_call_operand.hbm [shape: bf16[128,128], index: 7, kind: input, shape index: {}]
  %s8 = inlined_call_operand.vmem [shape: f32[1,128], index: 8, kind: input, shape index: {}]
  %s9 = inlined_call_operand.vmem [shape: f32[8,4], index: 9, kind: output, shape index: {}]
  %s10 = sld [smem:[#allocation0]]
  $region62: #{tpu_custom_call.1} parent=0
    _
  %s12 = ssub.s32 1, %s10
  %s13 = scalar_select 0, %s12, %s10
  %14 = sst [smem:[#allocation2]] %s3
  %15 = sst [smem:[#allocation3]] %s6
  $region1: #{tpu_custom_call.1} parent=0
    #allocation4 [shape = 'u8[4096]{0}', space=vmem, size = 0x1000, scoped, tag = 'input window, operand 0, single buffered']
    #allocation5 [shape = 's32[1]{0}', space=sflag, size = 0x4, scoped, tag = 'scoped memory for tpu_custom_call.1']
    #allocation6 [shape = 'u8[32768]{0}', space=vmem, size = 0x8000, scoped, tag = 'input window, operand 1, single buffered']
    #allocation7 [shape = 's32[1]{0}', space=sflag, size = 0x4, scoped, tag = 'scoped memory for tpu_custom_call.1']
    #allocation8 [shape = 'u8[32768]{0}', space=vmem, size = 0x8000, scoped, tag = 'input window, operand 4, single buffered']
    #allocation9 [shape = 'u8[32768]{0}', space=vmem, size = 0x8000, scoped, tag = 'input window, operand 7, single buffered']
    #allocation10 [shape = 's32[1]{0}', space=sflag, size = 0x4, scoped, tag = 'scoped memory for tpu_custom_call.1']
    %16 = vsyncpa [#allocation5], 0
    %17 = vsyncpa [#allocation7], 0
    %18 = vsyncpa [#allocation10], 0
    // Predicated region
    $region2: #{tpu_custom_call.1} parent=1 // pred_check
      _
    $region3: #{tpu_custom_call.1} parent=1 // pred_check_branch
      %20 = sbr.rel (0) target = $region5
    $region4: #{tpu_custom_call.1} parent=1 // pred_region
      %s22 = ssub.s32 128, 128
      %23 = vsyncadd [#allocation5], %s22
      %s25 = sshll.u32 [#allocation4], 4
      %s26 = int_to_ptr.vmem [resolvable:$true] %s25
      %28 = dma.hbm_to_vmem [thread:$0]  %s0, 128, %s26, [#allocation5]
    $region5: #{tpu_custom_call.1} parent=1 // pred_fallthru
      _
    // Predicated region
    $region6: #{tpu_custom_call.1} parent=1 // pred_check
      _
    $region7: #{tpu_custom_call.1} parent=1 // pred_check_branch
      %30 = sbr.rel (0) target = $region9
    $region8: #{tpu_custom_call.1} parent=1 // pred_region
      %s32 = ssub.s32 1024, 1024
      %33 = vsyncadd [#allocation7], %s32
      %s34 = sshll.u32 [#allocation6], 4
      %s35 = int_to_ptr.vmem [resolvable:$true] %s34
      %40 = dma.hbm_to_vmem [thread:$0]  %s1, 1024, %s35, [#allocation7], 64, 64, 4
    $region9: #{tpu_custom_call.1} parent=1 // pred_fallthru
      _
    // Predicated region
    $region10: #{tpu_custom_call.1} parent=1 // pred_check
      _
    $region11: #{tpu_custom_call.1} parent=1 // pred_check_branch
      %42 = sbr.rel (0) target = $region13
    $region12: #{tpu_custom_call.1} parent=1 // pred_region
      _
    $region13: #{tpu_custom_call.1} parent=1 // pred_fallthru
      _
    // Predicated region
    $region14: #{tpu_custom_call.1} parent=1 // pred_check
      _
    $region15: #{tpu_custom_call.1} parent=1 // pred_check_branch
      %44 = sbr.rel (0) target = $region17
    $region16: #{tpu_custom_call.1} parent=1 // pred_region
      _
    $region17: #{tpu_custom_call.1} parent=1 // pred_fallthru
      _
    // Predicated region
    $region18: #{tpu_custom_call.1} parent=1 // pred_check
      _
    $region19: #{tpu_custom_call.1} parent=1 // pred_check_branch
      %46 = sbr.rel (0) target = $region21
    $region20: #{tpu_custom_call.1} parent=1 // pred_region
      %s48 = ssub.s32 1024, 1024
      %49 = vsyncadd [#allocation7], %s48
      %s50 = sshll.u32 [#allocation8], 4
      %s51 = int_to_ptr.vmem [resolvable:$true] %s50
      %56 = dma.hbm_to_vmem [thread:$0]  %s4, 1024, %s51, [#allocation7], 64, 64, 4
    $region21: #{tpu_custom_call.1} parent=1 // pred_fallthru
      _
    // Predicated region
    $region22: #{tpu_custom_call.1} parent=1 // pred_check
      _
    $region23: #{tpu_custom_call.1} parent=1 // pred_check_branch
      %58 = sbr.rel (0) target = $region25
    $region24: #{tpu_custom_call.1} parent=1 // pred_region
      _
    $region25: #{tpu_custom_call.1} parent=1 // pred_fallthru
      _
    // Predicated region
    $region26: #{tpu_custom_call.1} parent=1 // pred_check
      _
    $region27: #{tpu_custom_call.1} parent=1 // pred_check_branch
      %60 = sbr.rel (0) target = $region29
    $region28: #{tpu_custom_call.1} parent=1 // pred_region
      _
    $region29: #{tpu_custom_call.1} parent=1 // pred_fallthru
      _
    // Predicated region
    $region30: #{tpu_custom_call.1} parent=1 // pred_check
      _
    $region31: #{tpu_custom_call.1} parent=1 // pred_check_branch
      %62 = sbr.rel (0) target = $region33
    $region32: #{tpu_custom_call.1} parent=1 // pred_region
      %s64 = ssub.s32 1024, 1024
      %65 = vsyncadd [#allocation10], %s64
      %s66 = sshll.u32 [#allocation9], 4
      %s67 = int_to_ptr.vmem [resolvable:$true] %s66
      %72 = dma.hbm_to_vmem [thread:$0]  %s7, 1024, %s67, [#allocation10], 64, 64, 4
    $region33: #{tpu_custom_call.1} parent=1 // pred_fallthru
      _
    // Predicated region
    $region34: #{tpu_custom_call.1} parent=1 // pred_check
      _
    $region35: #{tpu_custom_call.1} parent=1 // pred_check_branch
      %74 = sbr.rel (0) target = $region37
    $region36: #{tpu_custom_call.1} parent=1 // pred_region
      _
    $region37: #{tpu_custom_call.1} parent=1 // pred_fallthru
      _
    // Predicated region
    $region38: #{tpu_custom_call.1} parent=1 // pred_check
      _
    $region39: #{tpu_custom_call.1} parent=1 // pred_check_branch
      %76 = sbr.rel (0) target = $region41
    $region40: #{tpu_custom_call.1} parent=1 // pred_region
      %77 = dma.done [#allocation5], 128
    $region41: #{tpu_custom_call.1} parent=1 // pred_fallthru
      _
    // Predicated region
    $region42: #{tpu_custom_call.1} parent=1 // pred_check
      _
    $region43: #{tpu_custom_call.1} parent=1 // pred_check_branch
      %79 = sbr.rel (0) target = $region45
    $region44: #{tpu_custom_call.1} parent=1 // pred_region
      %80 = dma.done [#allocation7], 1024
    $region45: #{tpu_custom_call.1} parent=1 // pred_fallthru
      _
    // Predicated region
    $region46: #{tpu_custom_call.1} parent=1 // pred_check
      _
    $region47: #{tpu_custom_call.1} parent=1 // pred_check_branch
      %82 = sbr.rel (0) target = $region49
    $region48: #{tpu_custom_call.1} parent=1 // pred_region
      %83 = dma.done [#allocation7], 1024
    $region49: #{tpu_custom_call.1} parent=1 // pred_fallthru
      _
    // Predicated region
    $region50: #{tpu_custom_call.1} parent=1 // pred_check
      _
    $region51: #{tpu_custom_call.1} parent=1 // pred_check_branch
      %85 = sbr.rel (0) target = $region53
    $region52: #{tpu_custom_call.1} parent=1 // pred_region
      %86 = dma.done [#allocation10], 1024
    $region53: #{tpu_custom_call.1} parent=1 // pred_fallthru
      _
    %s88 = sld [smem:[#allocation2]]
    %s89 = sld [smem:[#allocation3]]
    %v90 = vld [vmem:[#allocation4] sm:$0xff]
    %v91 = vpack.c.bf16 %v90, %v90
    %v92 = vld [vmem:[#allocation6] sm:$0xf]
    %v93 = vld [vmem:[#allocation6 + $0x4] sm:$0xf]
    %v94 = vld [vmem:[#allocation6 + $0x8] sm:$0xf]
    %v95 = vld [vmem:[#allocation6 + $0xc] sm:$0xf]
    %v96 = vld [vmem:[#allocation6 + $0x10] sm:$0xf]
    %v97 = vld [vmem:[#allocation6 + $0x14] sm:$0xf]
    %v98 = vld [vmem:[#allocation6 + $0x18] sm:$0xf]
    %v99 = vld [vmem:[#allocation6 + $0x1c] sm:$0xf]
    %v100 = vld [vmem:[#allocation6 + $0x20] sm:$0xf]
    %v101 = vld [vmem:[#allocation6 + $0x24] sm:$0xf]
    %v102 = vld [vmem:[#allocation6 + $0x28] sm:$0xf]
    %v103 = vld [vmem:[#allocation6 + $0x2c] sm:$0xf]
    %v104 = vld [vmem:[#allocation6 + $0x30] sm:$0xf]
    %v105 = vld [vmem:[#allocation6 + $0x34] sm:$0xf]
    %v106 = vld [vmem:[#allocation6 + $0x38] sm:$0xf]
    %v107 = vld [vmem:[#allocation6 + $0x3c] sm:$0xf]
    %v108 = vld [vmem:[%s2] sm:$0x1]
    %v110 = vlaneseq
    %v111 = vshrl.u32 %v110, 7
    %v112 = vsub.s32 0, %v111
    %v113 = vrot.slane %v108, %v112
    %v131 = vunpack.c.l.b16 %v92
    %v132 = vunpack.c.l.b16 %v93
    %v133 = vunpack.c.l.b16 %v94
    %v134 = vunpack.c.l.b16 %v95
    %v135 = vunpack.c.l.b16 %v96
    %v136 = vunpack.c.l.b16 %v97
    %v137 = vunpack.c.l.b16 %v98
    %v138 = vunpack.c.l.b16 %v99
    %v139 = vunpack.c.l.b16 %v100
    %v140 = vunpack.c.l.b16 %v101
    %v141 = vunpack.c.l.b16 %v102
    %v142 = vunpack.c.l.b16 %v103
    %v143 = vunpack.c.l.b16 %v104
    %v144 = vunpack.c.l.b16 %v105
    %v145 = vunpack.c.l.b16 %v106
    %v146 = vunpack.c.l.b16 %v107
    %v147 = vpack.c.b16 %v132, %v131
    %v148 = vpack.c.b16 %v134, %v133
    %v149 = vpack.c.b16 %v136, %v135
    %v150 = vpack.c.b16 %v138, %v137
    %v151 = vpack.c.b16 %v140, %v139
    %v152 = vpack.c.b16 %v142, %v141
    %v153 = vpack.c.b16 %v144, %v143
    %v154 = vpack.c.b16 %v146, %v145
    %163 = vmatprep.subr.bf16.mxu0 0
    %164 = vmatpush1.bf16.msra.mxu0 %v147
    %165 = vmatprep.subr.bf16.mxu0 0
    %166 = vmatpush1.bf16.msra.mxu0 %v148
    %167 = vmatprep.subr.bf16.mxu0 0
    %168 = vmatpush1.bf16.msra.mxu0 %v149
    %169 = vmatprep.subr.bf16.mxu0 0
    %170 = vmatpush1.bf16.msra.mxu0 %v150
    %171 = vmatprep.subr.bf16.mxu0 0
    %172 = vmatpush1.bf16.msra.mxu0 %v151
    %173 = vmatprep.subr.bf16.mxu0 0
    %174 = vmatpush1.bf16.msra.mxu0 %v152
    %175 = vmatprep.subr.bf16.mxu0 0
    %176 = vmatpush1.bf16.msra.mxu0 %v153
    %177 = vmatprep.subr.bf16.mxu0 0
    %178 = vmatpush1.bf16.msra.mxu0 %v154
    %179 = vmatprep.subr.bf16.mxu0 0
    %180 = vmatpush1.bf16.msra.mxu0 0
    %181 = vmatprep.subr.bf16.mxu0 0
    %182 = vmatpush1.bf16.msra.mxu0 0
    %183 = vmatprep.subr.bf16.mxu0 0
    %184 = vmatpush1.bf16.msra.mxu0 0
    %185 = vmatprep.subr.bf16.mxu0 0
    %186 = vmatpush1.bf16.msra.mxu0 0
    %187 = vmatprep.subr.bf16.mxu0 0
    %188 = vmatpush1.bf16.msra.mxu0 0
    %189 = vmatprep.subr.bf16.mxu0 0
    %190 = vmatpush1.bf16.msra.mxu0 0
    %191 = vmatprep.subr.bf16.mxu0 0
    %192 = vmatpush1.bf16.msra.mxu0 0
    %193 = vmatprep.subr.bf16.mxu0 0
    %194 = vmatpush1.bf16.msra.mxu0 0
    %195 = vmatprep.mubr.bf16.mxu0 0
    %196 = vmatmul.mubr.bf16.gmra.mrb[0].mxu0 %v91
    %v197 = vpop.f32.mrb[0].mxu0
    %v198 = vadd.f32 %v113, %v197
    %v199 = vpop.f32.mrb[0].mxu0
    %v200 = vpop.f32.mrb[0].mxu0
    %v201 = vpop.f32.mrb[0].mxu0
    %202 = vdwg.mxu0
    %vm203 = vcmp.gt.f32.partialorder %v198, 0.0
    %v204 = vstv %s88
    %v205 = vmul.f32 %v204, %v198
    %v206 = vsel %vm203, %v198, %v205
    %v207 = vpack.c.bf16 %v206, %v206
    %v208 = vld [vmem:[#allocation8] sm:$0xf]
    %v209 = vld [vmem:[#allocation8 + $0x4] sm:$0xf]
    %v210 = vld [vmem:[#allocation8 + $0x8] sm:$0xf]
    %v211 = vld [vmem:[#allocation8 + $0xc] sm:$0xf]
    %v212 = vld [vmem:[#allocation8 + $0x10] sm:$0xf]
    %v213 = vld [vmem:[#allocation8 + $0x14] sm:$0xf]
    %v214 = vld [vmem:[#allocation8 + $0x18] sm:$0xf]
    %v215 = vld [vmem:[#allocation8 + $0x1c] sm:$0xf]
    %v216 = vld [vmem:[#allocation8 + $0x20] sm:$0xf]
    %v217 = vld [vmem:[#allocation8 + $0x24] sm:$0xf]
    %v218 = vld [vmem:[#allocation8 + $0x28] sm:$0xf]
    %v219 = vld [vmem:[#allocation8 + $0x2c] sm:$0xf]
    %v220 = vld [vmem:[#allocation8 + $0x30] sm:$0xf]
    %v221 = vld [vmem:[#allocation8 + $0x34] sm:$0xf]
    %v222 = vld [vmem:[#allocation8 + $0x38] sm:$0xf]
    %v223 = vld [vmem:[#allocation8 + $0x3c] sm:$0xf]
    %v224 = vld [vmem:[%s5] sm:$0x1]
    %v226 = vlaneseq
    %v227 = vshrl.u32 %v226, 7
    %v228 = vsub.s32 0, %v227
    %v229 = vrot.slane %v224, %v228
    %v247 = vunpack.c.l.b16 %v208
    %v248 = vunpack.c.l.b16 %v209
    %v249 = vunpack.c.l.b16 %v210
    %v250 = vunpack.c.l.b16 %v211
    %v251 = vunpack.c.l.b16 %v212
    %v252 = vunpack.c.l.b16 %v213
    %v253 = vunpack.c.l.b16 %v214
    %v254 = vunpack.c.l.b16 %v215
    %v255 = vunpack.c.l.b16 %v216
    %v256 = vunpack.c.l.b16 %v217
    %v257 = vunpack.c.l.b16 %v218
    %v258 = vunpack.c.l.b16 %v219
    %v259 = vunpack.c.l.b16 %v220
    %v260 = vunpack.c.l.b16 %v221
    %v261 = vunpack.c.l.b16 %v222
    %v262 = vunpack.c.l.b16 %v223
    %v263 = vpack.c.b16 %v248, %v247
    %v264 = vpack.c.b16 %v250, %v249
    %v265 = vpack.c.b16 %v252, %v251
    %v266 = vpack.c.b16 %v254, %v253
    %v267 = vpack.c.b16 %v256, %v255
    %v268 = vpack.c.b16 %v258, %v257
    %v269 = vpack.c.b16 %v260, %v259
    %v270 = vpack.c.b16 %v262, %v261
    %279 = vmatprep.subr.bf16.mxu0 0
    %280 = vmatpush1.bf16.msra.mxu0 %v263
    %281 = vmatprep.subr.bf16.mxu0 0
    %282 = vmatpush1.bf16.msra.mxu0 %v264
    %283 = vmatprep.subr.bf16.mxu0 0
    %284 = vmatpush1.bf16.msra.mxu0 %v265
    %285 = vmatprep.subr.bf16.mxu0 0
    %286 = vmatpush1.bf16.msra.mxu0 %v266
    %287 = vmatprep.subr.bf16.mxu0 0
    %288 = vmatpush1.bf16.msra.mxu0 %v267
    %289 = vmatprep.subr.bf16.mxu0 0
    %290 = vmatpush1.bf16.msra.mxu0 %v268
    %291 = vmatprep.subr.bf16.mxu0 0
    %292 = vmatpush1.bf16.msra.mxu0 %v269
    %293 = vmatprep.subr.bf16.mxu0 0
    %294 = vmatpush1.bf16.msra.mxu0 %v270
    %295 = vmatprep.subr.bf16.mxu0 0
    %296 = vmatpush1.bf16.msra.mxu0 0
    %297 = vmatprep.subr.bf16.mxu0 0
    %298 = vmatpush1.bf16.msra.mxu0 0
    %299 = vmatprep.subr.bf16.mxu0 0
    %300 = vmatpush1.bf16.msra.mxu0 0
    %301 = vmatprep.subr.bf16.mxu0 0
    %302 = vmatpush1.bf16.msra.mxu0 0
    %303 = vmatprep.subr.bf16.mxu0 0
    %304 = vmatpush1.bf16.msra.mxu0 0
    %305 = vmatprep.subr.bf16.mxu0 0
    %306 = vmatpush1.bf16.msra.mxu0 0
    %307 = vmatprep.subr.bf16.mxu0 0
    %308 = vmatpush1.bf16.msra.mxu0 0
    %309 = vmatprep.subr.bf16.mxu0 0
    %310 = vmatpush1.bf16.msra.mxu0 0
    %311 = vmatprep.mubr.bf16.mxu0 0
    %312 = vmatmul.mubr.bf16.gmra.mrb[0].mxu0 %v207
    %v313 = vpop.f32.mrb[0].mxu0
    %v314 = vadd.f32 %v229, %v313
    %v315 = vpop.f32.mrb[0].mxu0
    %v316 = vpop.f32.mrb[0].mxu0
    %v317 = vpop.f32.mrb[0].mxu0
    %318 = vdwg.mxu0
    %vm319 = vcmp.gt.f32.partialorder %v314, 0.0
    %v320 = vstv %s89
    %v321 = vmul.f32 %v320, %v314
    %v322 = vsel %vm319, %v314, %v321
    %v323 = vpack.c.bf16 %v322, %v322
    %v324 = vld [vmem:[#allocation9] sm:$0xf]
    %v325 = vld [vmem:[#allocation9 + $0x4] sm:$0xf]
    %v326 = vld [vmem:[#allocation9 + $0x8] sm:$0xf]
    %v327 = vld [vmem:[#allocation9 + $0xc] sm:$0xf]
    %v328 = vld [vmem:[#allocation9 + $0x10] sm:$0xf]
    %v329 = vld [vmem:[#allocation9 + $0x14] sm:$0xf]
    %v330 = vld [vmem:[#allocation9 + $0x18] sm:$0xf]
    %v331 = vld [vmem:[#allocation9 + $0x1c] sm:$0xf]
    %v332 = vld [vmem:[#allocation9 + $0x20] sm:$0xf]
    %v333 = vld [vmem:[#allocation9 + $0x24] sm:$0xf]
    %v334 = vld [vmem:[#allocation9 + $0x28] sm:$0xf]
    %v335 = vld [vmem:[#allocation9 + $0x2c] sm:$0xf]
    %v336 = vld [vmem:[#allocation9 + $0x30] sm:$0xf]
    %v337 = vld [vmem:[#allocation9 + $0x34] sm:$0xf]
    %v338 = vld [vmem:[#allocation9 + $0x38] sm:$0xf]
    %v339 = vld [vmem:[#allocation9 + $0x3c] sm:$0xf]
    %v340 = vld [vmem:[%s8] sm:$0x1]
    %v342 = vlaneseq
    %v343 = vshrl.u32 %v342, 7
    %v344 = vsub.s32 0, %v343
    %v345 = vrot.slane %v340, %v344
    %v363 = vunpack.c.l.b16 %v324
    %v364 = vunpack.c.l.b16 %v325
    %v365 = vunpack.c.l.b16 %v326
    %v366 = vunpack.c.l.b16 %v327
    %v367 = vunpack.c.l.b16 %v328
    %v368 = vunpack.c.l.b16 %v329
    %v369 = vunpack.c.l.b16 %v330
    %v370 = vunpack.c.l.b16 %v331
    %v371 = vunpack.c.l.b16 %v332
    %v372 = vunpack.c.l.b16 %v333
    %v373 = vunpack.c.l.b16 %v334
    %v374 = vunpack.c.l.b16 %v335
    %v375 = vunpack.c.l.b16 %v336
    %v376 = vunpack.c.l.b16 %v337
    %v377 = vunpack.c.l.b16 %v338
    %v378 = vunpack.c.l.b16 %v339
    %v379 = vpack.c.b16 %v364, %v363
    %v380 = vpack.c.b16 %v366, %v365
    %v381 = vpack.c.b16 %v368, %v367
    %v382 = vpack.c.b16 %v370, %v369
    %v383 = vpack.c.b16 %v372, %v371
    %v384 = vpack.c.b16 %v374, %v373
    %v385 = vpack.c.b16 %v376, %v375
    %v386 = vpack.c.b16 %v378, %v377
    %395 = vmatprep.subr.bf16.mxu0 0
    %396 = vmatpush1.bf16.msra.mxu0 %v379
    %397 = vmatprep.subr.bf16.mxu0 0
    %398 = vmatpush1.bf16.msra.mxu0 %v380
    %399 = vmatprep.subr.bf16.mxu0 0
    %400 = vmatpush1.bf16.msra.mxu0 %v381
    %401 = vmatprep.subr.bf16.mxu0 0
    %402 = vmatpush1.bf16.msra.mxu0 %v382
    %403 = vmatprep.subr.bf16.mxu0 0
    %404 = vmatpush1.bf16.msra.mxu0 %v383
    %405 = vmatprep.subr.bf16.mxu0 0
    %406 = vmatpush1.bf16.msra.mxu0 %v384
    %407 = vmatprep.subr.bf16.mxu0 0
    %408 = vmatpush1.bf16.msra.mxu0 %v385
    %409 = vmatprep.subr.bf16.mxu0 0
    %410 = vmatpush1.bf16.msra.mxu0 %v386
    %411 = vmatprep.subr.bf16.mxu0 0
    %412 = vmatpush1.bf16.msra.mxu0 0
    %413 = vmatprep.subr.bf16.mxu0 0
    %414 = vmatpush1.bf16.msra.mxu0 0
    %415 = vmatprep.subr.bf16.mxu0 0
    %416 = vmatpush1.bf16.msra.mxu0 0
    %417 = vmatprep.subr.bf16.mxu0 0
    %418 = vmatpush1.bf16.msra.mxu0 0
    %419 = vmatprep.subr.bf16.mxu0 0
    %420 = vmatpush1.bf16.msra.mxu0 0
    %421 = vmatprep.subr.bf16.mxu0 0
    %422 = vmatpush1.bf16.msra.mxu0 0
    %423 = vmatprep.subr.bf16.mxu0 0
    %424 = vmatpush1.bf16.msra.mxu0 0
    %425 = vmatprep.subr.bf16.mxu0 0
    %426 = vmatpush1.bf16.msra.mxu0 0
    %427 = vmatprep.mubr.bf16.mxu0 0
    %428 = vmatmul.mubr.bf16.gmra.mrb[0].mxu0 %v323
    %v429 = vpop.f32.mrb[0].mxu0
    %v430 = vadd.f32 %v345, %v429
    %v431 = vpop.f32.mrb[0].mxu0
    %v432 = vpop.f32.mrb[0].mxu0
    %v433 = vpop.f32.mrb[0].mxu0
    %434 = vdwg.mxu0
    %435 = vmax.xlane.f32.xlu0 %v430
    %v436 = vpop.xlane.xlu0 %435
    %v437 = vsub.f32 %v430, %v436
    %v438 = vmul.f32 %v437, 1.442695
    %v439 = vpow.pop %v438
    %440 = vadd.xlane.f32.xlu0 %v439
    %v441 = vpop.xlane.xlu0 %440
    %v442 = vlog2.pop %v441
    %v443 = vmul.f32 %v442, 0.6931472
    %v444 = vsub.f32 %v437, %v443
    %vm445 = vcmask 31744
    %446 = vst.msk [vmem:[%s9] sm:$0xff] %vm445, %v444
    // Predicated region
    $region54: #{tpu_custom_call.1} parent=1 // pred_check
      _
    $region55: #{tpu_custom_call.1} parent=1 // pred_check_branch
      %448 = sbr.rel (0) target = $region57
    $region56: #{tpu_custom_call.1} parent=1 // pred_region
      _
    $region57: #{tpu_custom_call.1} parent=1 // pred_fallthru
      _
    // Predicated region
    $region58: #{tpu_custom_call.1} parent=1 // pred_check
      _
    $region59: #{tpu_custom_call.1} parent=1 // pred_check_branch
      %450 = sbr.rel (0) target = $region61
    $region60: #{tpu_custom_call.1} parent=1 // pred_region
      _
    $region61: #{tpu_custom_call.1} parent=1 // pred_fallthru
      _
    %451 = vsyncpa [#allocation5], 1
    %452 = vsyncpa [#allocation7], 1
    %453 = vsyncpa [#allocation10], 1

</llo_original>
